<compile_context>
chip_gen: v5e
topology: v5e:2x2
jax: 0.10.0
libtpu: 0.0.40
codegen_flags: <defaults>
</compile_context>

<pallas_src>
import jax
import jax.numpy as jnp
from jax.experimental import pallas as pl
from jax.experimental.pallas import tpu as pltpu


def _round_up(x, m):
    return ((x + m - 1) // m) * m


def gcn_layer_f_kernel(x_ref, w_ref, b_ref, o_ref):
    # x_ref: (tn, in_feats), w_ref: (in_feats, tf), b_ref: (1, tf), o_ref: (tn, tf)
    y = jnp.dot(x_ref[...], w_ref[...], preferred_element_type=jnp.float32)
    y = y + b_ref[...].astype(jnp.float32)          # broadcast bias over rows
    o_ref[...] = jnp.maximum(y, 0.0).astype(o_ref.dtype)


def gcn_layer_f(feature, weight_t, bias, *, tile_n=512, compute_dtype=None):
    """relu(feature @ weight_t + bias) via Pallas.

    feature:  [N, in_feats]
    weight_t: [in_feats, out_feats]   (nn.Linear weight transposed)
    bias:     [out_feats]
    compute_dtype: optionally cast feature/weight to e.g. jnp.bfloat16
                   (MXU accumulation stays f32); default keeps input dtype.
    """
    n, in_feats = feature.shape
    out_feats = weight_t.shape[1]
    out_dtype = feature.dtype
    cdt = compute_dtype if compute_dtype is not None else feature.dtype

    # ---- lane-dense output: pad out_feats up to a multiple of 128 ----
    out_p = _round_up(out_feats, 128)
    # ---- row tiling: multiple of 8 (sublane), capped at tile_n; pad N up ----
    tn = min(_round_up(tile_n, 8), _round_up(n, 8))
    n_p = _round_up(n, tn)

    # ---- output-feature tiling (only for very wide layers, keeps weight tile bounded) ----
    if out_p <= 2048:
        tf = out_p
    else:
        tf = 128
        for cand in (2048, 1024, 512, 256):
            if out_p % cand == 0:
                tf = cand
                break

    # ---- pad operands (zeros: padded rows/cols are sliced off, ReLU(0)=0 on cols) ----
    feature_p = feature
    if n_p != n:
        feature_p = jnp.pad(feature, ((0, n_p - n), (0, 0)))
    weight_p = weight_t
    bias_p = bias
    if out_p != out_feats:
        weight_p = jnp.pad(weight_t, ((0, 0), (0, out_p - out_feats)))
        bias_p = jnp.pad(bias, ((0, out_p - out_feats),))
    bias2d = bias_p.reshape(1, out_p).astype(jnp.float32)

    feature_p = feature_p.astype(cdt)
    weight_p = weight_p.astype(cdt)

    # ---- VMEM budget: raise scoped limit only if the default would be exceeded ----
    isz = jnp.dtype(cdt).itemsize
    osz = jnp.dtype(out_dtype).itemsize
    vmem_need = 2 * (tn * in_feats * isz          # feature tile (double-buffered)
                     + in_feats * tf * isz        # weight tile
                     + tf * 4                     # bias tile
                     + tn * tf * osz)             # output tile
    vmem_limit = None
    if vmem_need > 32 * 1024 * 1024:
        vmem_limit = min(int(vmem_need * 5 // 4), 64 * 1024 * 1024)
    # TODO(synk): for very deep in_feats (weight tile itself >~16 MiB) add a K grid
    # axis with an f32 VMEM accumulator + pl.when init/finalize instead of a resident weight.

    cost = pl.CostEstimate(
        flops=2 * n_p * in_feats * out_p,
        transcendentals=0,
        bytes_accessed=(n_p * in_feats * isz
                        + in_feats * out_p * isz
                        + out_p * 4
                        + n_p * out_p * osz),
    )

    out_padded = pl.pallas_call(
        gcn_layer_f_kernel,
        out_shape=jax.ShapeDtypeStruct((n_p, out_p), out_dtype),
        grid_spec=pltpu.PrefetchScalarGridSpec(
            num_scalar_prefetch=0,
            grid=(n_p // tn, out_p // tf),
            in_specs=[
                pl.BlockSpec((tn, in_feats), lambda i, j: (i, 0)),      # row tile of features
                pl.BlockSpec((in_feats, tf), lambda i, j: (0, j)),      # weight column tile
                pl.BlockSpec((1, tf), lambda i, j: (0, j)),             # bias tile
            ],
            out_specs=pl.BlockSpec((tn, tf), lambda i, j: (i, j)),
        ),
        compiler_params=pltpu.CompilerParams(
            dimension_semantics=("parallel", "parallel"),
            vmem_limit_bytes=vmem_limit,
        ),
        cost_estimate=cost,
    )(feature_p, weight_p, bias2d)

    # slice back to original (unpadded) shape
    return out_padded[:n, :out_feats]


class GCNLayerFPallas:
    """Mirror of the PyTorch GCNLayerF module (dropout unused / eval mode)."""

    def __init__(self, in_feats, out_feats, dropout=None, key=jax.random.PRNGKey(0),
                 compute_dtype=None):
        self.dropout = dropout            # identity in eval mode
        self.compute_dtype = compute_dtype
        kw, kb = jax.random.split(key)
        # Deterministic init mimicking nn.Linear's uniform(-1/sqrt(fan_in), 1/sqrt(fan_in)).
        bound = 1.0 / (in_feats ** 0.5)
        w = jax.random.uniform(kw, (out_feats, in_feats), jnp.float32, -bound, bound)
        b = jax.random.uniform(kb, (out_feats,), jnp.float32, -bound, bound)
        self.weight_t = jnp.asarray(w.T)  # store pre-transposed: [in_feats, out_feats]
        self.bias = b

    def __call__(self, g, feature, g_rev=None):
        x = gcn_layer_f(feature, self.weight_t, self.bias,
                        compute_dtype=self.compute_dtype)
        # dropout is identity here (None or eval mode)
        return (x, g_rev)


if __name__ == "__main__":
    key = jax.random.PRNGKey(0)
    k_feat, k_mod = jax.random.split(key)

    N, IN_FEATS, OUT_FEATS = 16, 32, 64
    feature = jax.random.normal(k_feat, (N, IN_FEATS), dtype=jnp.float32)

    layer = GCNLayerFPallas(IN_FEATS, OUT_FEATS, dropout=None, key=k_mod)

    g = None          # graph is unused by the fake-GCN forward
    g_rev = None
    out, g_rev_out = layer(g, feature, g_rev)
    out = jax.block_until_ready(out)

    # Pure-JAX reference check (f32 compute path).
    ref = jnp.maximum(feature @ layer.weight_t + layer.bias, 0.0)
    assert out.shape == (N, OUT_FEATS)
    assert jnp.allclose(out, ref, atol=1e-5, rtol=1e-5), "mismatch vs reference"

    # Also exercise the padding path (non-divisible N, narrow out_feats already padded).
    N2 = 37
    feat2 = jax.random.normal(jax.random.PRNGKey(3), (N2, IN_FEATS), dtype=jnp.float32)
    out2, _ = layer(g, feat2, g_rev)
    out2 = jax.block_until_ready(out2)
    ref2 = jnp.maximum(feat2 @ layer.weight_t + layer.bias, 0.0)
    assert out2.shape == (N2, OUT_FEATS)
    assert jnp.allclose(out2, ref2, atol=1e-5, rtol=1e-5), "mismatch vs reference (padded N)"

    print("KERNEL_OK")
</pallas_src>

<mosaic_0001>
module attributes {stable_mosaic.version = 11 : i64} {
  func.func @gcn_layer_f_kernel(%arg0: i32, %arg1: i32, %arg2: memref<16x32xf32, #tpu.memory_space<vmem>>, %arg3: memref<32x128xf32, #tpu.memory_space<vmem>>, %arg4: memref<1x128xf32, #tpu.memory_space<vmem>>, %arg5: memref<16x128xf32, #tpu.memory_space<vmem>>) attributes {dimension_semantics = [#tpu.dimension_semantics<parallel>, #tpu.dimension_semantics<parallel>], iteration_bounds = array<i64: 1, 1>, scalar_prefetch = 0 : i64, scratch_operands = 0 : i64, tpu.core_type = #tpu.core_type<tc>, window_params = [{transform_indices = @transform_0, window_bounds = array<i64: 16, 32>}, {transform_indices = @transform_1, window_bounds = array<i64: 32, 128>}, {transform_indices = @transform_2, window_bounds = array<i64: 1, 128>}, {transform_indices = @transform_3, window_bounds = array<i64: 16, 128>}]} {
    %c0 = arith.constant 0 : index
    %c0_0 = arith.constant 0 : index
    %0 = vector.load %arg2[%c0, %c0_0] : memref<16x32xf32, #tpu.memory_space<vmem>>, vector<16x32xf32>
    %c0_1 = arith.constant 0 : index
    %c0_2 = arith.constant 0 : index
    %1 = vector.load %arg3[%c0_1, %c0_2] : memref<32x128xf32, #tpu.memory_space<vmem>>, vector<32x128xf32>
    %cst = arith.constant dense<0.000000e+00> : vector<16x128xf32>
    %2 = tpu.matmul %0, %1, %cst {dimension_numbers = #tpu.dot_dimension_numbers<[1], [0], [0], [1], [0, 0, 1, 1], [], []>} : vector<16x32xf32>, vector<32x128xf32>, vector<16x128xf32> -> vector<16x128xf32>
    %c0_3 = arith.constant 0 : index
    %c0_4 = arith.constant 0 : index
    %3 = vector.load %arg4[%c0_3, %c0_4] : memref<1x128xf32, #tpu.memory_space<vmem>>, vector<1x128xf32>
    %4 = vector.broadcast %3 : vector<1x128xf32> to vector<16x128xf32>
    %5 = arith.addf %2, %4 : vector<16x128xf32>
    %cst_5 = arith.constant 0.000000e+00 : f32
    %6 = vector.broadcast %cst_5 : f32 to vector<16x128xf32>
    %7 = arith.maximumf %5, %6 : vector<16x128xf32>
    %c0_6 = arith.constant 0 : index
    %c0_7 = arith.constant 0 : index
    %8 = vector.load %arg5[%c0_6, %c0_7] : memref<16x128xf32, #tpu.memory_space<vmem>>, vector<16x128xf32>
    tpu.vector_store %arg5[%c0_6, %c0_7], %7 {strides = array<i32>} : memref<16x128xf32, #tpu.memory_space<vmem>>, vector<16x128xf32>,
    return
  }
  func.func @transform_0(%arg0: i32, %arg1: i32) -> (i32, i32) {
    %c0_i32 = arith.constant 0 : i32
    %c0_i32_0 = arith.constant 0 : i32
    return %arg0, %c0_i32 : i32, i32
  }
  func.func @transform_1(%arg0: i32, %arg1: i32) -> (i32, i32) {
    %c0_i32 = arith.constant 0 : i32
    %c0_i32_0 = arith.constant 0 : i32
    return %c0_i32, %arg1 : i32, i32
  }
  func.func @transform_2(%arg0: i32, %arg1: i32) -> (i32, i32) {
    %c0_i32 = arith.constant 0 : i32
    %c0_i32_0 = arith.constant 0 : i32
    return %c0_i32, %arg1 : i32, i32
  }
  func.func @transform_3(%arg0: i32, %arg1: i32) -> (i32, i32) {
    %c0_i32 = arith.constant 0 : i32
    return %arg0, %arg1 : i32, i32
  }
}

</mosaic_0001>

<llo_original>
// kernel: tpu_custom_call.1
$region0: #{tpu_custom_call.1}
  #allocation0 [shape = 'u32[]', space=smem, size = 0x4, offset = 0x4, fixed_abs, tag = 'smem constant byte address 0x4 - core index']
  #allocation1 [shape = 'u32[72,128]{1,0:T(1,128)}', space=vmem, size = 0x9000, scoped, tag = 'internal scratch']
  %s0 = inlined_call_operand.hbm [shape: f32[16,32], index: 0, kind: input, shape index: {}]
  %s1 = inlined_call_operand.hbm [shape: f32[32,128], index: 1, kind: input, shape index: {}]
  %s2 = inlined_call_operand.vmem [shape: f32[1,128], index: 2, kind: input, shape index: {}]
  %s3 = inlined_call_operand.hbm [shape: f32[16,128], index: 3, kind: output, shape index: {}]
  %s4 = sld [smem:[#allocation0]]
  $region30: #{tpu_custom_call.1} parent=0
    _
  %s6 = ssub.s32 1, %s4
  %s7 = scalar_select 0, %s6, %s4
  $region1: #{tpu_custom_call.1} parent=0
    #allocation2 [shape = 'u8[8192]{0}', space=vmem, size = 0x2000, scoped, tag = 'input window, operand 0, single buffered']
    #allocation3 [shape = 's32[1]{0}', space=sflag, size = 0x4, scoped, tag = 'scoped memory for tpu_custom_call.1']
    #allocation4 [shape = 's32[1]{0}', space=sflag, size = 0x4, scoped, tag = 'scoped memory for tpu_custom_call.1']
    #allocation5 [shape = 'u8[16384]{0}', space=vmem, size = 0x4000, scoped, tag = 'input window, operand 1, single buffered']
    #allocation6 [shape = 's32[1]{0}', space=sflag, size = 0x4, scoped, tag = 'scoped memory for tpu_custom_call.1']
    #allocation7 [shape = 'u8[8192]{0}', space=vmem, size = 0x2000, scoped, tag = 'output window, operand 0, single buffered']
    %8 = vsyncpa [#allocation3], 0
    %9 = vsyncpa [#allocation6], 0
    %10 = vsyncpa [#allocation4], 0
    // Predicated region
    $region2: #{tpu_custom_call.1} parent=1 // pred_check
      _
    $region3: #{tpu_custom_call.1} parent=1 // pred_check_branch
      %12 = sbr.rel (0) target = $region5
    $region4: #{tpu_custom_call.1} parent=1 // pred_region
      %14 = vsyncadd [#allocation3], 0
      %s15 = sshll.u32 %s0, 4
      %s16 = int_to_ptr.hbm [resolvable:$true] %s15
      %s17 = sshll.u32 [#allocation2], 4
      %s18 = int_to_ptr.vmem [resolvable:$true] %s17
      %23 = dma.hbm_to_vmem [thread:$0]  %s16, 256, %s18, [#allocation3], 128, 128, 8
    $region5: #{tpu_custom_call.1} parent=1 // pred_fallthru
      _
    // Predicated region
    $region6: #{tpu_custom_call.1} parent=1 // pred_check
      _
    $region7: #{tpu_custom_call.1} parent=1 // pred_check_branch
      %25 = sbr.rel (0) target = $region9
    $region8: #{tpu_custom_call.1} parent=1 // pred_region
      %27 = vsyncadd [#allocation6], 0
      %s28 = sshll.u32 %s1, 4
      %s29 = int_to_ptr.hbm [resolvable:$true] %s28
      %s30 = sshll.u32 [#allocation5], 4
      %s31 = int_to_ptr.vmem [resolvable:$true] %s30
      %36 = dma.hbm_to_vmem [thread:$0]  %s29, 512, %s31, [#allocation6], 128, 128, 8
    $region9: #{tpu_custom_call.1} parent=1 // pred_fallthru
      _
    // Predicated region
    $region10: #{tpu_custom_call.1} parent=1 // pred_check
      _
    $region11: #{tpu_custom_call.1} parent=1 // pred_check_branch
      %38 = sbr.rel (0) target = $region13
    $region12: #{tpu_custom_call.1} parent=1 // pred_region
      _
    $region13: #{tpu_custom_call.1} parent=1 // pred_fallthru
      _
    // Predicated region
    $region14: #{tpu_custom_call.1} parent=1 // pred_check
      _
    $region15: #{tpu_custom_call.1} parent=1 // pred_check_branch
      %40 = sbr.rel (0) target = $region17
    $region16: #{tpu_custom_call.1} parent=1 // pred_region
      %42 = dma.done [#allocation3], 256
    $region17: #{tpu_custom_call.1} parent=1 // pred_fallthru
      _
    // Predicated region
    $region18: #{tpu_custom_call.1} parent=1 // pred_check
      _
    $region19: #{tpu_custom_call.1} parent=1 // pred_check_branch
      %44 = sbr.rel (0) target = $region21
    $region20: #{tpu_custom_call.1} parent=1 // pred_region
      %46 = dma.done [#allocation6], 512
    $region21: #{tpu_custom_call.1} parent=1 // pred_fallthru
      _
    %v47 = vld [vmem:[#allocation2] sm:$0xff]
    %v48 = vld [vmem:[#allocation2 + $0x8] sm:$0xff]
    %v49 = vld [vmem:[#allocation5] sm:$0xff]
    %v50 = vld [vmem:[#allocation5 + $0x8] sm:$0xff]
    %v51 = vld [vmem:[#allocation5 + $0x10] sm:$0xff]
    %v52 = vld [vmem:[#allocation5 + $0x18] sm:$0xff]
    %v53 = vld [vmem:[%s2] sm:$0x1]
    %v55 = vperm.slane %v53, 0
    %vm57 = vcmask 261120
    %v59 = vsel %vm57, %v47, 0
    %v62 = vsel %vm57, %v48, 0
    %64 = vmatpush.msra.mxu0 0.0
    %65 = vmatpush.msra.mxu0 0.0
    %66 = vmatpush.msra.mxu0 0.0
    %67 = vmatpush.msra.mxu0 0.0
    %68 = vmatpush.msra.mxu0 0.0
    %69 = vmatpush.msra.mxu0 0.0
    %70 = vmatpush.msra.mxu0 0.0
    %71 = vmatpush.msra.mxu0 0.0
    %72 = vmatpush.msra.mxu0 0.0
    %73 = vmatpush.msra.mxu0 0.0
    %74 = vmatpush.msra.mxu0 0.0
    %75 = vmatpush.msra.mxu0 0.0
    %76 = vmatpush.msra.mxu0 %v52
    %77 = vmatpush.msra.mxu0 %v51
    %78 = vmatpush.msra.mxu0 %v50
    %79 = vmatpush.msra.mxu0 %v49
    %80 = vmatmul.f32.gmra.mxu0 %v59
    %v81 = vpop.f32.mrf.mxu0
    %v82 = vadd.f32 %v55, %v81
    %83 = vmatmul.f32.gmra.mxu0 %v62
    %v84 = vpop.f32.mrf.mxu0
    %v85 = vadd.f32 %v55, %v84
    %86 = vdwg.mxu0
    %v87 = vmax.f32 %v82, 0.0
    %v88 = vmax.f32 %v85, 0.0
    %89 = vst [vmem:[#allocation7] sm:$0xff] %v87
    %90 = vst [vmem:[#allocation7 + $0x8] sm:$0xff] %v88
    // Predicated region
    $region22: #{tpu_custom_call.1} parent=1 // pred_check
      _
    $region23: #{tpu_custom_call.1} parent=1 // pred_check_branch
      %92 = sbr.rel (0) target = $region25
    $region24: #{tpu_custom_call.1} parent=1 // pred_region
      %94 = vsyncadd [#allocation4], 0
      %s95 = sshll.u32 [#allocation7], 4
      %s96 = int_to_ptr.vmem [resolvable:$true] %s95
      %s97 = sshll.u32 %s3, 4
      %s98 = int_to_ptr.hbm [resolvable:$true] %s97
      %103 = dma.vmem_to_hbm [thread:$0]  %s96, 256, %s98, [#allocation4], 128, 128, 8
    $region25: #{tpu_custom_call.1} parent=1 // pred_fallthru
      _
    // Predicated region
    $region26: #{tpu_custom_call.1} parent=1 // pred_check
      _
    $region27: #{tpu_custom_call.1} parent=1 // pred_check_branch
      %105 = sbr.rel (0) target = $region29
    $region28: #{tpu_custom_call.1} parent=1 // pred_region
      %107 = dma.done [#allocation4], 256
    $region29: #{tpu_custom_call.1} parent=1 // pred_fallthru
      _
    %108 = vsyncpa [#allocation3], 1
    %109 = vsyncpa [#allocation6], 1
    %110 = vsyncpa [#allocation4], 1

</llo_original>
